<compile_context>
chip_gen: v7x
topology: tpu7x:2x2x1
jax: 0.10.0
libtpu: 0.0.40
codegen_flags: <defaults>
</compile_context>

<pallas_src>
import functools

import jax
import jax.numpy as jnp
from jax.experimental import pallas as pl
from jax.experimental.pallas import tpu as pltpu

VMEM = pltpu.MemorySpace.VMEM

_K_TILE = 512  # contraction tile when K is large (multiple of 128)


# ----------------------------------------------------------------------------
# Pallas kernels
# ----------------------------------------------------------------------------
def _convmm_kernel(w_ref, p_ref, b_ref, o_ref, acc_ref, *, relu):
    """acc (Cout, ts) += W (Cout, tk) @ rhs (tk, ts); epilogue on last K step."""
    @pl.when(pl.program_id(2) == 0)
    def _():
        acc_ref[...] = jnp.zeros_like(acc_ref)

    acc_ref[...] += jnp.dot(w_ref[...], p_ref[...],
                            preferred_element_type=jnp.float32)

    @pl.when(pl.program_id(2) == pl.num_programs(2) - 1)
    def _():
        r = acc_ref[...] + b_ref[...]
        if relu:
            r = jnp.maximum(r, 0.0)
        o_ref[...] = r.astype(o_ref.dtype)


def _convmm_res_kernel(w_ref, p_ref, b_ref, r_ref, o_ref, acc_ref, *, relu):
    @pl.when(pl.program_id(2) == 0)
    def _():
        acc_ref[...] = jnp.zeros_like(acc_ref)

    acc_ref[...] += jnp.dot(w_ref[...], p_ref[...],
                            preferred_element_type=jnp.float32)

    @pl.when(pl.program_id(2) == pl.num_programs(2) - 1)
    def _():
        r = acc_ref[...] + b_ref[...] + r_ref[...].astype(jnp.float32)
        if relu:
            r = jnp.maximum(r, 0.0)
        o_ref[...] = r.astype(o_ref.dtype)


def _maxpool_kernel(x_ref, o_ref):
    # x: (R, P, ts2) — reduce pooling-window axis (sublanes), lanes stay dense.
    o_ref[...] = jnp.max(x_ref[...], axis=1).astype(o_ref.dtype)


def _head_kernel(f_ref, w1_ref, b1_ref, w2_ref, b2_ref, o_ref):
    # GlobalPooling (mean over flattened spatial) -> Linear -> ReLU -> Linear.
    pooled = jnp.mean(f_ref[...].astype(jnp.float32), axis=-1)       # (B, C)
    h = jnp.dot(pooled, w1_ref[...], preferred_element_type=jnp.float32)
    h = jnp.maximum(h + b1_ref[...], 0.0)
    o_ref[...] = (jnp.dot(h, w2_ref[...], preferred_element_type=jnp.float32)
                  + b2_ref[...]).astype(o_ref.dtype)


# ----------------------------------------------------------------------------
# Wrappers (glue stays thin; compute stays in Pallas)
# ----------------------------------------------------------------------------
def _pick_s_tile(S):
    """Largest nice lane-dense tile dividing S, else full extent."""
    for t in (512, 256, 128):
        if S % t == 0:
            return t
    return S  # full extent (allowed even if < 128)


def matmul_cm(w, rhs, b, *, relu=False, residual=None):
    """Channels-major tiled matmul: out[b] = relu(W @ rhs[b] + bias [+ res[b]]).

    w:   (Cout, K)    bf16
    rhs: (B, K, S)    bf16   (S = flattened pixels on the lane axis)
    b:   (Cout,)      f32
    residual: (B, Cout, S) bf16 or None
    returns (B, Cout, S) bf16
    """
    Cout, K = w.shape
    B, K2, S = rhs.shape
    assert K == K2

    ts = _pick_s_tile(S)

    # K tiling (+ zero padding up to a multiple of the K tile when needed).
    if K > _K_TILE:
        tk = _K_TILE
        Kp = pl.cdiv(K, tk) * tk
        if Kp != K:
            w = jnp.pad(w, ((0, 0), (0, Kp - K)))
            rhs = jnp.pad(rhs, ((0, 0), (0, Kp - K), (0, 0)))
        K = Kp
    else:
        tk = K

    grid = (B, S // ts, K // tk)
    bias2 = b.reshape(Cout, 1).astype(jnp.float32)

    in_specs = [
        pl.BlockSpec((Cout, tk), lambda bb, si, ki: (0, ki)),
        pl.BlockSpec((None, tk, ts), lambda bb, si, ki: (bb, ki, si)),
        pl.BlockSpec((Cout, 1), lambda bb, si, ki: (0, 0)),
    ]
    args = [w, rhs, bias2]
    if residual is not None:
        in_specs.append(pl.BlockSpec((None, Cout, ts),
                                     lambda bb, si, ki: (bb, 0, si)))
        args.append(residual)
        kern = functools.partial(_convmm_res_kernel, relu=relu)
    else:
        kern = functools.partial(_convmm_kernel, relu=relu)

    # Cost estimate for XLA scheduling around the custom call.
    flops = 2 * B * S * K * Cout
    bytes_accessed = (w.size * 2 + rhs.size * 2 + B * Cout * S * 2
                      + (residual.size * 2 if residual is not None else 0)
                      + bias2.size * 4)

    # VMEM budget: double-buffered input/output tiles + f32 accumulator,
    # with headroom (re-derived per call; safe on v7x's 64 MiB physical VMEM).
    tile_bytes = ((Cout * tk + tk * ts + Cout * ts
                   + (Cout * ts if residual is not None else 0)) * 2) * 2 \
                 + Cout * ts * 4 + Cout * 4
    vmem_limit = int(max(4 * tile_bytes, 8 * 2 ** 20))

    return pl.pallas_call(
        kern,
        out_shape=jax.ShapeDtypeStruct((B, Cout, S), jnp.bfloat16),
        grid=grid,
        in_specs=in_specs,
        out_specs=pl.BlockSpec((None, Cout, ts), lambda bb, si, ki: (bb, 0, si)),
        scratch_shapes=[pltpu.VMEM((Cout, ts), jnp.float32)],
        compiler_params=pltpu.CompilerParams(
            dimension_semantics=("parallel", "parallel", "arbitrary"),
            vmem_limit_bytes=vmem_limit),
        cost_estimate=pl.CostEstimate(
            flops=flops, transcendentals=0, bytes_accessed=bytes_accessed),
    )(*args)


def conv3d(x, w, b, *, k, relu=False, residual=None):
    """3D conv, stride 1, SAME padding, channels-major matmul formulation.

    x: (B, C, D, H, W) bf16;  w: (Cout, C*k^3) bf16;  b: (Cout,) f32.
    """
    B, C, D, H, W = x.shape
    Cout = w.shape[0]
    S = D * H * W
    if k == 1:
        rhs = x.reshape(B, C, S)                      # no im2col for 1x1x1
    else:
        patches = jax.lax.conv_general_dilated_patches(
            x, filter_shape=(k, k, k), window_strides=(1, 1, 1), padding="SAME"
        )                                             # (B, C*k^3, D, H, W)
        rhs = patches.reshape(B, C * k ** 3, S)       # contiguous, no transpose
    rhs = rhs.astype(jnp.bfloat16)
    res = None if residual is None else residual.reshape(B, Cout, S)
    out = matmul_cm(w, rhs, b, relu=relu, residual=res)   # (B, Cout, S) bf16
    return out.reshape(B, Cout, D, H, W)


def maxpool3d(x, pool):
    """Lane-dense max pool (kernel == stride == pool)."""
    B, C, D, H, W = x.shape
    pd, ph, pw = pool
    # TODO(synk): PyTorch floors non-divisible sizes; we require divisibility.
    assert D % pd == 0 and H % ph == 0 and W % pw == 0
    D2, H2, W2 = D // pd, H // ph, W // pw
    S2 = D2 * H2 * W2
    P = pd * ph * pw
    R = B * C
    xr = x.reshape(B, C, D2, pd, H2, ph, W2, pw)
    xr = xr.transpose(0, 1, 3, 5, 7, 2, 4, 6).reshape(R, P, S2)
    ts2 = _pick_s_tile(S2)
    out = pl.pallas_call(
        _maxpool_kernel,
        out_shape=jax.ShapeDtypeStruct((R, S2), x.dtype),
        grid=(S2 // ts2,),
        in_specs=[pl.BlockSpec((R, P, ts2), lambda si: (0, 0, si))],
        out_specs=pl.BlockSpec((R, ts2), lambda si: (0, si)),
        compiler_params=pltpu.CompilerParams(
            dimension_semantics=("parallel",)),
    )(xr)
    return out.reshape(B, C, D2, H2, W2)


def classification_head(features, w1, b1, w2, b2):
    """GlobalPooling -> Linear -> ReLU -> Linear (tiny; single VMEM-resident kernel)."""
    B, C = features.shape[0], features.shape[1]
    S = 1
    for s in features.shape[2:]:
        S *= s
    f = features.reshape(B, C, S)
    final_n = w2.shape[1]
    return pl.pallas_call(
        _head_kernel,
        out_shape=jax.ShapeDtypeStruct((B, final_n), jnp.float32),
        in_specs=[pl.BlockSpec(memory_space=VMEM)] * 5,
        out_specs=pl.BlockSpec(memory_space=VMEM),
    )(f, w1, b1.reshape(1, -1), w2, b2.reshape(1, -1))


# ----------------------------------------------------------------------------
# CatNet parameters + forward
# ----------------------------------------------------------------------------
def init_catnet_params(key, n_channels, resnet_structure, n_classes):
    params = {}
    scale = 0.1
    keys = iter(jax.random.split(key, 64))

    def nrm(shape, dtype=jnp.float32):
        return (scale * jax.random.normal(next(keys), shape, jnp.float32)).astype(dtype)

    c0 = resnet_structure[0][0]
    params["stem_w"] = nrm((c0, n_channels * 27), jnp.bfloat16)   # stem conv k=3
    params["stem_b"] = nrm((c0,))
    for i, (in_c, inter_c, k, n_ops) in enumerate(resnet_structure):
        for j in range(n_ops):
            params[f"s{i}b{j}_w1"] = nrm((inter_c, in_c * k ** 3), jnp.bfloat16)
            params[f"s{i}b{j}_b1"] = nrm((inter_c,))
            params[f"s{i}b{j}_w2"] = nrm((in_c, inter_c * k ** 3), jnp.bfloat16)
            params[f"s{i}b{j}_b2"] = nrm((in_c,))
        if i + 1 < len(resnet_structure):
            nxt = resnet_structure[i + 1][0]
            params[f"t{i}_w"] = nrm((nxt, in_c), jnp.bfloat16)    # 1x1x1 transition
            params[f"t{i}_b"] = nrm((nxt,))
    last_size = resnet_structure[-1][0]
    final_n = 1 if n_classes == 2 else n_classes
    params["head_w1"] = nrm((last_size, last_size))
    params["head_b1"] = nrm((last_size,))
    params["head_w2"] = nrm((last_size, final_n))
    params["head_b2"] = nrm((final_n,))
    return params


def catnet_forward(params, x, resnet_structure, maxpool_structure):
    # ---- feature extraction (ResNet-style backbone, bf16 activations) ----
    x = x.astype(jnp.bfloat16)
    x = conv3d(x, params["stem_w"], params["stem_b"], k=3, relu=True)
    for i, ((in_c, inter_c, k, n_ops), mp) in enumerate(
        zip(resnet_structure, maxpool_structure)
    ):
        for j in range(n_ops):
            skip = x
            h = conv3d(
                x, params[f"s{i}b{j}_w1"], params[f"s{i}b{j}_b1"], k=k, relu=True
            )
            x = conv3d(
                h,
                params[f"s{i}b{j}_w2"],
                params[f"s{i}b{j}_b2"],
                k=k,
                relu=True,
                residual=skip,
            )
        x = maxpool3d(x, mp)
        if i + 1 < len(resnet_structure):
            x = conv3d(x, params[f"t{i}_w"], params[f"t{i}_b"], k=1, relu=True)
    features = x
    # ---- classification layer: GlobalPooling -> Linear -> ReLU -> Linear ----
    return classification_head(
        features,
        params["head_w1"],
        params["head_b1"],
        params["head_w2"],
        params["head_b2"],
    )


if __name__ == "__main__":
    B, C, D, H, W = 2, 1, 8, 8, 8                       # small 3D input (NCDHW)
    resnet_structure = [(8, 16, 3, 1), (16, 32, 3, 1)]  # scaled-down default
    maxpool_structure = [(2, 2, 2), (2, 2, 2)]
    n_classes = 2                                       # => final_n = 1 logit

    key = jax.random.PRNGKey(0)
    kx, kp = jax.random.split(key)
    x = jax.random.normal(kx, (B, C, D, H, W), jnp.float32)
    params = init_catnet_params(kp, C, resnet_structure, n_classes)

    out = catnet_forward(params, x, resnet_structure, maxpool_structure)
    out = jax.block_until_ready(out)
    assert out.shape == (B, 1), out.shape
    assert jnp.all(jnp.isfinite(out))
    print("KERNEL_OK")
</pallas_src>

<mosaic_0001>
module attributes {stable_mosaic.version = 11 : i64} {
  func.func @_convmm_kernel(%arg0: i32, %arg1: i32, %arg2: i32, %arg3: memref<8x27xbf16, #tpu.memory_space<vmem>>, %arg4: memref<1x27x512xbf16, #tpu.memory_space<vmem>>, %arg5: memref<8x1xf32, #tpu.memory_space<vmem>>, %arg6: memref<1x8x512xbf16, #tpu.memory_space<vmem>>, %arg7: memref<8x512xf32, #tpu.memory_space<vmem>>) attributes {dimension_semantics = [#tpu.dimension_semantics<parallel>, #tpu.dimension_semantics<parallel>, #tpu.dimension_semantics<arbitrary>], iteration_bounds = array<i64: 2, 1, 1>, scalar_prefetch = 0 : i64, scratch_operands = 1 : i64, tpu.core_type = #tpu.core_type<tc>, window_params = [{transform_indices = @transform_0, window_bounds = array<i64: 8, 27>}, {transform_indices = @transform_1, window_bounds = array<i64: 1, 27, 512>}, {pipeline_mode = #tpu.pipeline_mode<synchronous>, transform_indices = @transform_2, window_bounds = array<i64: 8, 1>}, {transform_indices = @transform_3, window_bounds = array<i64: 1, 8, 512>}]} {
    %c0_i32 = arith.constant 0 : i32
    %0 = arith.cmpi eq, %arg2, %c0_i32 : i32
    %1 = arith.extui %0 : i1 to i32
    %c0_i32_0 = arith.constant 0 : i32
    %2 = arith.cmpi ne, %1, %c0_i32_0 : i32
    scf.if %2 {
      %cst_11 = arith.constant 0.000000e+00 : f32
      %13 = vector.broadcast %cst_11 : f32 to vector<8x512xf32>
      %c0_12 = arith.constant 0 : index
      %c0_13 = arith.constant 0 : index
      %14 = vector.load %arg7[%c0_12, %c0_13] : memref<8x512xf32, #tpu.memory_space<vmem>>, vector<8x512xf32>
      tpu.vector_store %arg7[%c0_12, %c0_13], %13 {strides = array<i32>} : memref<8x512xf32, #tpu.memory_space<vmem>>, vector<8x512xf32>,
    } else {
    }
    %c0 = arith.constant 0 : index
    %c0_1 = arith.constant 0 : index
    %3 = vector.load %arg7[%c0, %c0_1] : memref<8x512xf32, #tpu.memory_space<vmem>>, vector<8x512xf32>
    %c0_2 = arith.constant 0 : index
    %c0_3 = arith.constant 0 : index
    %4 = vector.load %arg3[%c0_2, %c0_3] : memref<8x27xbf16, #tpu.memory_space<vmem>>, vector<8x27xbf16>
    %c0_4 = arith.constant 0 : index
    %c0_5 = arith.constant 0 : index
    %c0_6 = arith.constant 0 : index
    %5 = vector.load %arg4[%c0_4, %c0_5, %c0_6] : memref<1x27x512xbf16, #tpu.memory_space<vmem>>, vector<1x27x512xbf16>
    %6 = vector.shape_cast %5 : vector<1x27x512xbf16> to vector<27x512xbf16>
    %cst = arith.constant dense<0.000000e+00> : vector<8x512xf32>
    %7 = tpu.matmul %4, %6, %cst {dimension_numbers = #tpu.dot_dimension_numbers<[1], [0], [0], [1], [0, 0, 1, 1], [], []>} : vector<8x27xbf16>, vector<27x512xbf16>, vector<8x512xf32> -> vector<8x512xf32>
    %8 = arith.addf %3, %7 : vector<8x512xf32>
    %c0_7 = arith.constant 0 : index
    %c0_8 = arith.constant 0 : index
    %9 = vector.load %arg7[%c0_7, %c0_8] : memref<8x512xf32, #tpu.memory_space<vmem>>, vector<8x512xf32>
    tpu.vector_store %arg7[%c0_7, %c0_8], %8 {strides = array<i32>} : memref<8x512xf32, #tpu.memory_space<vmem>>, vector<8x512xf32>,
    %c0_i32_9 = arith.constant 0 : i32
    %10 = arith.cmpi eq, %arg2, %c0_i32_9 : i32
    %11 = arith.extui %10 : i1 to i32
    %c0_i32_10 = arith.constant 0 : i32
    %12 = arith.cmpi ne, %11, %c0_i32_10 : i32
    scf.if %12 {
      %c0_11 = arith.constant 0 : index
      %c0_12 = arith.constant 0 : index
      %13 = vector.load %arg7[%c0_11, %c0_12] : memref<8x512xf32, #tpu.memory_space<vmem>>, vector<8x512xf32>
      %c0_13 = arith.constant 0 : index
      %c0_14 = arith.constant 0 : index
      %14 = vector.load %arg5[%c0_13, %c0_14] : memref<8x1xf32, #tpu.memory_space<vmem>>, vector<8x1xf32>
      %15 = vector.broadcast %14 : vector<8x1xf32> to vector<8x512xf32>
      %16 = arith.addf %13, %15 : vector<8x512xf32>
      %cst_15 = arith.constant 0.000000e+00 : f32
      %17 = vector.broadcast %cst_15 : f32 to vector<8x512xf32>
      %18 = arith.maximumf %16, %17 : vector<8x512xf32>
      %19 = arith.truncf %18 : vector<8x512xf32> to vector<8x512xbf16>
      %c0_16 = arith.constant 0 : index
      %c0_17 = arith.constant 0 : index
      %c0_18 = arith.constant 0 : index
      %20 = vector.load %arg6[%c0_16, %c0_17, %c0_18] : memref<1x8x512xbf16, #tpu.memory_space<vmem>>, vector<1x8x512xbf16>
      %21 = vector.shape_cast %20 : vector<1x8x512xbf16> to vector<8x512xbf16>
      %22 = vector.shape_cast %19 : vector<8x512xbf16> to vector<1x8x512xbf16>
      tpu.vector_store %arg6[%c0_16, %c0_17, %c0_18], %22 {strides = array<i32>} : memref<1x8x512xbf16, #tpu.memory_space<vmem>>, vector<1x8x512xbf16>,
    } else {
    }
    return
  }
  func.func @transform_0(%arg0: i32, %arg1: i32, %arg2: i32) -> (i32, i32) {
    %c0_i32 = arith.constant 0 : i32
    %c0_i32_0 = arith.constant 0 : i32
    return %c0_i32, %arg2 : i32, i32
  }
  func.func @transform_1(%arg0: i32, %arg1: i32, %arg2: i32) -> (i32, i32, i32) {
    %c0_i32 = arith.constant 0 : i32
    return %arg0, %arg2, %arg1 : i32, i32, i32
  }
  func.func @transform_2(%arg0: i32, %arg1: i32, %arg2: i32) -> (i32, i32) {
    %c0_i32 = arith.constant 0 : i32
    %c0_i32_0 = arith.constant 0 : i32
    %c0_i32_1 = arith.constant 0 : i32
    return %c0_i32, %c0_i32_0 : i32, i32
  }
  func.func @transform_3(%arg0: i32, %arg1: i32, %arg2: i32) -> (i32, i32, i32) {
    %c0_i32 = arith.constant 0 : i32
    %c0_i32_0 = arith.constant 0 : i32
    return %arg0, %c0_i32, %arg1 : i32, i32, i32
  }
}

</mosaic_0001>

<llo_original>
// kernel: tpu_custom_call.1
$region0: #{tpu_custom_call.1}
  #allocation0 [shape = 'u32[]', space=smem, size = 0x4, offset = 0x4, fixed_abs, tag = 'smem constant byte address 0x4 - core index']
  #allocation1 [shape = 'u32[144,128]{1,0:T(1,128)}', space=vmem, size = 0x12000, scoped, tag = 'internal scratch']
  #allocation2 [shape = 'f32[8,512]{1,0:T(8,128)}', space=vmem, size = 0x4000, scoped, tag = 'scratch operand']
  %s0 = inlined_call_operand.vmem [shape: bf16[8,27], index: 0, kind: input, shape index: {}]
  %s1 = inlined_call_operand.vmem [shape: bf16[2,27,512], index: 1, kind: input, shape index: {}]
  %s2 = inlined_call_operand.vmem [shape: f32[8,1], index: 2, kind: input, shape index: {}]
  %s3 = inlined_call_operand.hbm [shape: bf16[2,8,512], index: 3, kind: output, shape index: {}]
  %s4 = sld [smem:[#allocation0]]
  $region53: #{tpu_custom_call.1} parent=0
    _
  %s6 = ssub.s32 1, %s4
  %s7 = scalar_select 0, %s6, %s4
  $region1: #{tpu_custom_call.1} parent=0
    #allocation3 [shape = 'u8[16384]{0}', space=vmem, size = 0x4000, scoped, tag = 'output window, operand 0']
    #allocation4 [shape = 's32[2]{0}', space=sflag, size = 0x8, scoped, tag = 'scoped memory for tpu_custom_call.1']
    %8 = vsyncpa [#allocation4], 0
    %s9 = scalar_lea.sflag [#allocation4], 1
    %10 = vsyncpa %s9, 0
    loop: start=0, step=1, limit=4
    $region2: #{tpu_custom_call.1} parent=1 // loop_pre_header
      _
    $region3: #{tpu_custom_call.1} parent=1 // loop_header
      %s12 = sphi 0, %s16
      %p13 = scmp.ge.s32.totalorder %s12, 4
      %s19 = sphi 0, %s38
      %s20 = sphi 0, %s34
      %s21 = sphi 0, %s30
      %s22 = sphi 0, %s19
      %s23 = sphi 0, %s20
      %s24 = sphi 0, %s21
      %s25 = sphi 0, %s22
      %s26 = sphi 0, %s23
      %s27 = sphi 0, %s24
      %s41 = sphi 0, %s43
      %s44 = sphi 0, %s41
      %s45 = sphi 0, %s44
      %s61 = sphi 0, %s45
      %s71 = sphi 0, %s73
      %s74 = sphi 0, %s71
      %s75 = sphi 0, %s74
      %s91 = sphi 0, %s75
      %s95 = sphi 0, %s95
      %s97 = sphi 0, %s95
      %s98 = sphi 0, %s97
      %s112 = sphi 0, %s98
      %s120 = sphi 0, %s122
      %s123 = sphi 0, %s120
      %s124 = sphi 0, %s123
      %s140 = sphi 0, %s124
    $region4: #{tpu_custom_call.1} parent=1 // loop_header_branch
      %15 = sbr.rel (%p13) target = $region8
    $region5: #{tpu_custom_call.1} parent=1 // loop_body
      %s17 = ssub.s32 %s12, 1
      %s18 = ssub.s32 %s12, 2
      %s28 = sadd.s32 1, %s21
      %p29 = scmp.ge.s32.totalorder %s28, 1
      %s30 = scalar_select %p29, 0, %s28
      %s31 = sadd.s32 1, %s20
      %s32 = scalar_select %p29, %s31, %s20
      %p33 = scmp.ge.s32.totalorder %s32, 1
      %s34 = scalar_select %p33, 0, %s32
      %s35 = sadd.s32 1, %s19
      %s36 = scalar_select %p33, %s35, %s19
      %p37 = scmp.ge.s32.totalorder %s36, 2
      %s38 = scalar_select %p37, 0, %s36
      %s39 = ssub.s32 %s21, %s30
      %p40 = scmp.eq.s32.totalorder %s39, 0
      %s42 = sadd.s32 %s41, 1
      %s43 = scalar_select %p40, %s41, %s42
      %p46 = pneg %p40
      %p47 = scmp.eq.s32.totalorder %s12, 1
      %p48 = por %p46, %p47
      %p49 = scmp.ne.s32.totalorder %s41, %s44
      %p50 = scmp.eq.s32.totalorder %s12, 0
      %p51 = por %p49, %p50
      %p52 = scmp.ne.s32.totalorder %s41, %s44
      %p53 = scmp.eq.s32.totalorder %s17, 1
      %p54 = por %p52, %p53
      %p55 = scmp.ne.s32.totalorder %s44, %s45
      %p56 = scmp.eq.s32.totalorder %s17, 0
      %p57 = por %p55, %p56
      %p58 = scmp.ne.s32.totalorder %s44, %s45
      %p59 = scmp.eq.s32.totalorder %s18, 1
      %p60 = por %p58, %p59
      %p62 = scmp.ne.s32.totalorder %s45, %s61
      %p63 = scmp.eq.s32.totalorder %s18, 0
      %p64 = por %p62, %p63
      %s65 = ssub.s32 %s19, %s38
      %s66 = ssub.s32 %s21, %s30
      %s67 = sor.u32 %s65, %s66
      %s68 = ssub.s32 %s20, %s34
      %s69 = sor.u32 %s67, %s68
      %p70 = scmp.eq.s32.totalorder %s69, 0
      %s72 = sadd.s32 %s71, 1
      %s73 = scalar_select %p70, %s71, %s72
      %p76 = pneg %p70
      %p77 = scmp.eq.s32.totalorder %s12, 1
      %p78 = por %p76, %p77
      %p79 = scmp.ne.s32.totalorder %s71, %s74
      %p80 = scmp.eq.s32.totalorder %s12, 0
      %p81 = por %p79, %p80
      %p82 = scmp.ne.s32.totalorder %s71, %s74
      %p83 = scmp.eq.s32.totalorder %s17, 1
      %p84 = por %p82, %p83
      %p85 = scmp.ne.s32.totalorder %s74, %s75
      %p86 = scmp.eq.s32.totalorder %s17, 0
      %p87 = por %p85, %p86
      %p88 = scmp.ne.s32.totalorder %s74, %s75
      %p89 = scmp.eq.s32.totalorder %s18, 1
      %p90 = por %p88, %p89
      %p92 = scmp.ne.s32.totalorder %s75, %s91
      %p93 = scmp.eq.s32.totalorder %s18, 0
      %p94 = por %p92, %p93
      %s96 = sadd.s32 %s95, 1
      %p99 = scmp.eq.s32.totalorder %s12, 1
      %p100 = scmp.ne.s32.totalorder %s95, %s97
      %p101 = scmp.eq.s32.totalorder %s12, 0
      %p102 = por %p100, %p101
      %p103 = scmp.ne.s32.totalorder %s95, %s97
      %p104 = scmp.eq.s32.totalorder %s17, 1
      %p105 = por %p103, %p104
      %p106 = scmp.ne.s32.totalorder %s97, %s98
      %p107 = scmp.eq.s32.totalorder %s17, 0
      %p108 = por %p106, %p107
      %p109 = scmp.ne.s32.totalorder %s97, %s98
      %p110 = scmp.eq.s32.totalorder %s18, 1
      %p111 = por %p109, %p110
      %p113 = scmp.ne.s32.totalorder %s98, %s112
      %p114 = scmp.eq.s32.totalorder %s18, 0
      %p115 = por %p113, %p114
      %s116 = ssub.s32 %s19, %s38
      %s117 = ssub.s32 %s20, %s34
      %s118 = sor.u32 %s116, %s117
      %p119 = scmp.eq.s32.totalorder %s118, 0
      %s121 = sadd.s32 %s120, 1
      %s122 = scalar_select %p119, %s120, %s121
      %p125 = pneg %p119
      %p126 = scmp.eq.s32.totalorder %s12, 1
      %p127 = por %p125, %p126
      %p128 = scmp.ne.s32.totalorder %s120, %s123
      %p129 = scmp.eq.s32.totalorder %s12, 0
      %p130 = por %p128, %p129
      %p131 = scmp.ne.s32.totalorder %s120, %s123
      %p132 = scmp.eq.s32.totalorder %s17, 1
      %p133 = por %p131, %p132
      %p134 = scmp.ne.s32.totalorder %s123, %s124
      %p135 = scmp.eq.s32.totalorder %s17, 0
      %p136 = por %p134, %p135
      %p137 = scmp.ne.s32.totalorder %s123, %s124
      %p138 = scmp.eq.s32.totalorder %s18, 1
      %p139 = por %p137, %p138
      %p141 = scmp.ne.s32.totalorder %s124, %s140
      %p142 = scmp.eq.s32.totalorder %s18, 0
      %p143 = por %p141, %p142
      %p144 = scmp.le.s32.totalorder 1, %s12
      %p145 = scmp.lt.s32.totalorder %s12, 3
      %p146 = pnand %p144, %p145
      %p147 = pneg %p146
      // Predicated region
      $region9: #{tpu_custom_call.1} parent=5 // pred_check
        _
      $region10: #{tpu_custom_call.1} parent=5 // pred_check_branch
        %149 = sbr.rel (%p146) target = $region12
      $region11: #{tpu_custom_call.1} parent=5 // pred_region
        %s150 = ssub.s32 %s12, 1
        // Predicated region
        $region13: #{tpu_custom_call.1} parent=11 // pred_check
          %p151 = pneg %p57
        $region14: #{tpu_custom_call.1} parent=11 // pred_check_branch
          %153 = sbr.rel (%p151) target = $region16
        $region15: #{tpu_custom_call.1} parent=11 // pred_region
          %p154 = scmp.lt.s32.totalorder %s24, 0
          %s155 = scalar_select %p154, %s24, 0
          %s156 = smul.addr %s155, 4
          %s157 = scalar_lea.vmem %s0, %s156
        $region16: #{tpu_custom_call.1} parent=11 // pred_fallthru
          _
        // Predicated region
        $region17: #{tpu_custom_call.1} parent=11 // pred_check
          %p158 = pneg %p108
        $region18: #{tpu_custom_call.1} parent=11 // pred_check_branch
          %160 = sbr.rel (%p158) target = $region20
        $region19: #{tpu_custom_call.1} parent=11 // pred_region
          _
        $region20: #{tpu_custom_call.1} parent=11 // pred_fallthru
          _
      $region12: #{tpu_custom_call.1} parent=5 // pred_fallthru
        _
      %p161 = scmp.lt.s32.totalorder %s12, 2
      // Predicated region
      $region21: #{tpu_custom_call.1} parent=5 // pred_check
        %p162 = pneg %p161
      $region22: #{tpu_custom_call.1} parent=5 // pred_check_branch
        %164 = sbr.rel (%p162) target = $region24
      $region23: #{tpu_custom_call.1} parent=5 // pred_region
        // Predicated region
        $region25: #{tpu_custom_call.1} parent=23 // pred_check
          %p165 = pneg %p81
        $region26: #{tpu_custom_call.1} parent=23 // pred_check_branch
          %167 = sbr.rel (%p165) target = $region28
        $region27: #{tpu_custom_call.1} parent=23 // pred_region
          %s168 = smul.u32 4, %s21
          %s169 = smul.u32 4, %s20
          %p170 = scmp.lt.s32.totalorder %s19, 1
          %s171 = scalar_select %p170, %s19, 1
          %p172 = scmp.lt.s32.totalorder %s168, 3
          %s173 = scalar_select %p172, %s168, 3
          %p174 = scmp.lt.s32.totalorder %s169, 3
          %s175 = scalar_select %p174, %s169, 3
          %s176 = smul.addr %s173, 4
          %s177 = sadd.s32 %s175, %s176
          %s178 = smul.addr %s171, 16
          %s179 = sadd.s32 %s177, %s178
          %s180 = smul.addr %s179, 4
          %s181 = scalar_lea.vmem %s1, %s180
          %s182 = smul.u32 4, %s21
          %s183 = smul.u32 4, %s20
        $region28: #{tpu_custom_call.1} parent=23 // pred_fallthru
          _
      $region24: #{tpu_custom_call.1} parent=5 // pred_fallthru
        _
      %p184 = scmp.le.s32.totalorder 1, %s12
      %p185 = scmp.lt.s32.totalorder %s12, 3
      %p186 = pnand %p184, %p185
      %p187 = pneg %p186
      // Predicated region
      $region29: #{tpu_custom_call.1} parent=5 // pred_check
        _
      $region30: #{tpu_custom_call.1} parent=5 // pred_check_branch
        %189 = sbr.rel (%p186) target = $region32
      $region31: #{tpu_custom_call.1} parent=5 // pred_region
        %s190 = ssub.s32 %s12, 1
        %p191 = scmp.lt.s32.totalorder %s24, 0
        %s192 = scalar_select %p191, %s24, 0
        %s193 = smul.addr %s192, 4
        %s194 = scalar_lea.vmem %s0, %s193
        %p195 = pneg %p57
        %p196 = pneg %p54
        %s197 = smul.u32 4, %s24
        %s198 = smul.u32 4, %s23
        %p199 = scmp.lt.s32.totalorder %s22, 1
        %s200 = scalar_select %p199, %s22, 1
        %p201 = scmp.lt.s32.totalorder %s197, 3
        %s202 = scalar_select %p201, %s197, 3
        %p203 = scmp.lt.s32.totalorder %s198, 3
        %s204 = scalar_select %p203, %s198, 3
        %s205 = smul.addr %s202, 4
        %s206 = sadd.s32 %s204, %s205
        %s207 = smul.addr %s200, 16
        %s208 = sadd.s32 %s206, %s207
        %s209 = smul.addr %s208, 4
        %s210 = scalar_lea.vmem %s1, %s209
        %p211 = pneg %p87
        %p212 = pneg %p84
        %p213 = pneg %p108
        %p214 = pneg %p105
        %p215 = pneg %p136
        %p216 = pneg %p133
        %s217 = sand.u32 %s123, 1
        %s218 = scalar_lea.sflag [#allocation4], %s217
        %s219 = sand.u32 %s123, 1
        %s220 = smul.addr %s219, 16
        %s221 = scalar_lea.vmem [#allocation3], %s220
        %p222 = scmp.lt.s32.totalorder %s24, 0
        %s223 = scalar_select %p222, %s24, 0
        %s224 = smul.addr %s223, 4
        %s225 = scalar_lea.vmem %s0, %s224
        %s226 = smul.u32 4, %s24
        %s227 = smul.u32 4, %s23
        %p228 = scmp.lt.s32.totalorder %s22, 1
        %s229 = scalar_select %p228, %s22, 1
        %p230 = scmp.lt.s32.totalorder %s226, 3
        %s231 = scalar_select %p230, %s226, 3
        %p232 = scmp.lt.s32.totalorder %s227, 3
        %s233 = scalar_select %p232, %s227, 3
        %s234 = smul.addr %s231, 4
        %s235 = sadd.s32 %s233, %s234
        %s236 = smul.addr %s229, 16
        %s237 = sadd.s32 %s235, %s236
        %s238 = smul.addr %s237, 4
        %s239 = scalar_lea.vmem %s1, %s238
        %s240 = smul.u32 4, %s24
        %s241 = smul.u32 4, %s23
        %s242 = smul.u32 4, %s23
        %p244 = scmp.eq.s32.totalorder %s24, 0
        // Predicated region
        $region33: #{tpu_custom_call.1} parent=31 // pred_check
          %p245 = pneg %p244
        $region34: #{tpu_custom_call.1} parent=31 // pred_check_branch
          %247 = sbr.rel (%p245) target = $region36
        $region35: #{tpu_custom_call.1} parent=31 // pred_region
          %248 = vst [vmem:[#allocation2] sm:$0xff] 0.0
          %249 = vst [vmem:[#allocation2 + $0x8] sm:$0xff] 0.0
          %250 = vst [vmem:[#allocation2 + $0x10] sm:$0xff] 0.0
          %251 = vst [vmem:[#allocation2 + $0x18] sm:$0xff] 0.0
        $region36: #{tpu_custom_call.1} parent=31 // pred_fallthru
          _
        %v252 = vld [vmem:[#allocation2] sm:$0xff]
        %v253 = vld [vmem:[#allocation2 + $0x8] sm:$0xff]
        %v254 = vld [vmem:[#allocation2 + $0x10] sm:$0xff]
        %v255 = vld [vmem:[#allocation2 + $0x18] sm:$0xff]
        %v256 = vld [vmem:[%s225] sm:$0xf]
        %v257 = vld [vmem:[%s239] sm:$0xff]
        %v258 = vld [vmem:[%s239 + $0x8] sm:$0xff]
        %v259 = vld [vmem:[%s239 + $0x10] sm:$0xff]
        %v260 = vld [vmem:[%s239 + $0x18] sm:$0xff]
        %v261 = vld [vmem:[%s239 + $0x20] sm:$0xff]
        %v262 = vld [vmem:[%s239 + $0x28] sm:$0xff]
        %v263 = vld [vmem:[%s239 + $0x30] sm:$0x33]
        %v264 = vld [vmem:[%s239 + $0x38] sm:$0x33]
        %v273 = vunpack.c.l.b16 %v257
        %v274 = vunpack.c.h.b16 %v257
        %v275 = vunpack.c.l.b16 %v258
        %v276 = vunpack.c.h.b16 %v258
        %v277 = vunpack.c.l.b16 %v259
        %v278 = vunpack.c.h.b16 %v259
        %v279 = vunpack.c.l.b16 %v260
        %v280 = vunpack.c.h.b16 %v260
        %v281 = vunpack.c.l.b16 %v261
        %v282 = vunpack.c.h.b16 %v261
        %v283 = vunpack.c.l.b16 %v262
        %v284 = vunpack.c.h.b16 %v262
        %v285 = vunpack.c.l.b16 %v263
        %v286 = vunpack.c.h.b16 %v263
        %v287 = vunpack.c.l.b16 %v264
        %v288 = vunpack.c.h.b16 %v264
        %v289 = vpack.c.b16 %v277, %v273
        %v290 = vpack.c.b16 %v278, %v274
        %v291 = vpack.c.b16 %v279, %v275
        %v292 = vpack.c.b16 %v280, %v276
        %v293 = vpack.c.b16 %v285, %v281
        %v294 = vpack.c.b16 %v286, %v282
        %v295 = vpack.c.b16 %v287, %v283
        %v296 = vpack.c.b16 %v288, %v284
        %vm301 = vcmask 220160
        %v303 = vsel %vm301, %v256, 0
        %vm305 = vcmask 1044480
        %vm306 = vcmask 1045504
        %v307 = vsel %vm305, 4294967295, 65535
        %v308 = vsel %vm306, %v307, 0
        %v310 = vand.u32 %v293, %v308
        %v313 = vand.u32 %v294, %v308
        %v316 = vand.u32 %v295, %v308
        %v319 = vand.u32 %v296, %v308
        %321 = vmatprep.subr.bf16.mxu0 %v290
        %322 = vmatpush1.bf16.msra.mxu0 %v289
        %323 = vmatprep.subr.bf16.mxu0 %v313
        %324 = vmatpush1.bf16.msra.mxu0 %v310
        %325 = vmatprep.subr.bf16.mxu0 0
        %326 = vmatpush1.bf16.msra.mxu0 0
        %327 = vmatprep.subr.bf16.mxu0 0
        %328 = vmatpush1.bf16.msra.mxu0 0
        %329 = vmatprep.subr.bf16.mxu0 0
        %330 = vmatpush1.bf16.msra.mxu0 0
        %331 = vmatprep.subr.bf16.mxu0 0
        %332 = vmatpush1.bf16.msra.mxu0 0
        %333 = vmatprep.subr.bf16.mxu0 0
        %334 = vmatpush1.bf16.msra.mxu0 0
        %335 = vmatprep.subr.bf16.mxu0 0
        %336 = vmatpush1.bf16.msra.mxu0 0
        %337 = vmatprep.subr.bf16.mxu0 0
        %338 = vmatpush1.bf16.msra.mxu0 0
        %339 = vmatprep.subr.bf16.mxu0 0
        %340 = vmatpush1.bf16.msra.mxu0 0
        %341 = vmatprep.subr.bf16.mxu0 0
        %342 = vmatpush1.bf16.msra.mxu0 0
        %343 = vmatprep.subr.bf16.mxu0 0
        %344 = vmatpush1.bf16.msra.mxu0 0
        %345 = vmatprep.subr.bf16.mxu0 0
        %346 = vmatpush1.bf16.msra.mxu0 0
        %347 = vmatprep.subr.bf16.mxu0 0
        %348 = vmatpush1.bf16.msra.mxu0 0
        %349 = vmatprep.subr.bf16.mxu0 0
        %350 = vmatpush1.bf16.msra.mxu0 0
        %351 = vmatprep.subr.bf16.mxu0 0
        %352 = vmatpush1.bf16.msra.mxu0 0
        %353 = vmatprep.mubr.bf16.mxu0 0
        %354 = vmatmul.mubr.bf16.gmra.mrb[0].mxu0 %v303
        %v355 = vpop.f32.mrb[0].mxu0
        %v356 = vadd.f32 0.0, %v355
        %v357 = vpop.f32.mrb[0].mxu0
        %v358 = vadd.f32 0.0, %v357
        %v359 = vpop.f32.mrb[0].mxu0
        %v360 = vpop.f32.mrb[0].mxu0
        %361 = vdwg.mxu0
        %362 = vmatprep.subr.bf16.mxu0 %v292
        %363 = vmatpush1.bf16.msra.mxu0 %v291
        %364 = vmatprep.subr.bf16.mxu0 %v319
        %365 = vmatpush1.bf16.msra.mxu0 %v316
        %366 = vmatprep.subr.bf16.mxu0 0
        %367 = vmatpush1.bf16.msra.mxu0 0
        %368 = vmatprep.subr.bf16.mxu0 0
        %369 = vmatpush1.bf16.msra.mxu0 0
        %370 = vmatprep.subr.bf16.mxu0 0
        %371 = vmatpush1.bf16.msra.mxu0 0
        %372 = vmatprep.subr.bf16.mxu0 0
        %373 = vmatpush1.bf16.msra.mxu0 0
        %374 = vmatprep.subr.bf16.mxu0 0
        %375 = vmatpush1.bf16.msra.mxu0 0
        %376 = vmatprep.subr.bf16.mxu0 0
        %377 = vmatpush1.bf16.msra.mxu0 0
        %378 = vmatprep.subr.bf16.mxu0 0
        %379 = vmatpush1.bf16.msra.mxu0 0
        %380 = vmatprep.subr.bf16.mxu0 0
        %381 = vmatpush1.bf16.msra.mxu0 0
        %382 = vmatprep.subr.bf16.mxu0 0
        %383 = vmatpush1.bf16.msra.mxu0 0
        %384 = vmatprep.subr.bf16.mxu0 0
        %385 = vmatpush1.bf16.msra.mxu0 0
        %386 = vmatprep.subr.bf16.mxu0 0
        %387 = vmatpush1.bf16.msra.mxu0 0
        %388 = vmatprep.subr.bf16.mxu0 0
        %389 = vmatpush1.bf16.msra.mxu0 0
        %390 = vmatprep.subr.bf16.mxu0 0
        %391 = vmatpush1.bf16.msra.mxu0 0
        %392 = vmatprep.subr.bf16.mxu0 0
        %393 = vmatpush1.bf16.msra.mxu0 0
        %394 = vmatprep.mubr.bf16.mxu0 0
        %395 = vmatmul.mubr.bf16.gmra.mrb[0].mxu0 %v303
        %v396 = vpop.f32.mrb[0].mxu0
        %v397 = vadd.f32 0.0, %v396
        %v398 = vpop.f32.mrb[0].mxu0
        %v399 = vadd.f32 0.0, %v398
        %v400 = vpop.f32.mrb[0].mxu0
        %v401 = vpop.f32.mrb[0].mxu0
        %402 = vdwg.mxu0
        %v403 = vadd.f32 %v252, %v356
        %v404 = vadd.f32 %v253, %v358
        %v405 = vadd.f32 %v254, %v397
        %v406 = vadd.f32 %v255, %v399
        %407 = vst [vmem:[#allocation2] sm:$0xff] %v403
        %408 = vst [vmem:[#allocation2 + $0x8] sm:$0xff] %v404
        %409 = vst [vmem:[#allocation2 + $0x10] sm:$0xff] %v405
        %410 = vst [vmem:[#allocation2 + $0x18] sm:$0xff] %v406
        // Predicated region
        $region37: #{tpu_custom_call.1} parent=31 // pred_check
          %p411 = pneg %p244
        $region38: #{tpu_custom_call.1} parent=31 // pred_check_branch
          %413 = sbr.rel (%p411) target = $region40
        $region39: #{tpu_custom_call.1} parent=31 // pred_region
          %v414 = vld [vmem:[#allocation2] sm:$0xff]
          %v415 = vld [vmem:[#allocation2 + $0x8] sm:$0xff]
          %v416 = vld [vmem:[#allocation2 + $0x10] sm:$0xff]
          %v417 = vld [vmem:[#allocation2 + $0x18] sm:$0xff]
          %v418 = vld [vmem:[%s2] sm:$0xff]
          %420 = vset.pattern.permute.xlu0 0
          %421 = vperm.xlu0 %420, %v418
          %v422 = vpop.permute.xlu0 %421
          %v424 = vadd.f32 %v414, %v422
          %v425 = vadd.f32 %v415, %v422
          %v426 = vadd.f32 %v416, %v422
          %v427 = vadd.f32 %v417, %v422
          %v428 = vmax.f32 %v424, 0.0
          %v429 = vmax.f32 %v425, 0.0
          %v430 = vmax.f32 %v426, 0.0
          %v431 = vmax.f32 %v427, 0.0
          %v432 = vpack.c.bf16 %v428, %v428
          %v433 = vpack.c.bf16 %v429, %v429
          %v434 = vpack.c.bf16 %v430, %v430
          %v435 = vpack.c.bf16 %v431, %v431
          %v440 = vunpack.c.l.b16 %v432
          %v441 = vunpack.c.l.b16 %v433
          %v442 = vunpack.c.l.b16 %v434
          %v443 = vunpack.c.l.b16 %v435
          %v444 = vpack.c.b16 %v441, %v440
          %v445 = vpack.c.b16 %v443, %v442
          %448 = vst [vmem:[%s221] sm:$0xff] %v444
          %449 = vst [vmem:[%s221 + $0x8] sm:$0xff] %v445
        $region40: #{tpu_custom_call.1} parent=31 // pred_fallthru
          _
        %s450 = sand.u32 %s123, 1
        %s451 = scalar_lea.sflag [#allocation4], %s450
        %s452 = sand.u32 %s123, 1
        %s453 = smul.addr %s452, 16
        %s454 = scalar_lea.vmem [#allocation3], %s453
        // Predicated region
        $region41: #{tpu_custom_call.1} parent=31 // pred_check
          %p455 = pneg %p133
        $region42: #{tpu_custom_call.1} parent=31 // pred_check_branch
          %457 = sbr.rel (%p455) target = $region44
        $region43: #{tpu_custom_call.1} parent=31 // pred_region
          %s458 = smul.u32 4, %s23
          %s460 = ssub.s32 256, 256
          %461 = vsyncadd %s451, %s460
          %s462 = smul.addr %s22, 4
          %s463 = sadd.s32 %s458, %s462
          %s464 = smul.addr %s463, 64
          %s465 = scalar_lea.hbm %s3, %s464
          %s467 = sshll.u32 %s454, 4
          %s468 = int_to_ptr.vmem [resolvable:$true] %s467
          %470 = dma.vmem_to_hbm [thread:$0]  %s468, 256, %s465, %s451
        $region44: #{tpu_custom_call.1} parent=31 // pred_fallthru
          _
      $region32: #{tpu_custom_call.1} parent=5 // pred_fallthru
        _
      %p471 = scmp.le.s32.totalorder 2, %s12
      // Predicated region
      $region45: #{tpu_custom_call.1} parent=5 // pred_check
        %p472 = pneg %p471
      $region46: #{tpu_custom_call.1} parent=5 // pred_check_branch
        %474 = sbr.rel (%p472) target = $region48
      $region47: #{tpu_custom_call.1} parent=5 // pred_region
        %s475 = ssub.s32 %s12, 2
        // Predicated region
        $region49: #{tpu_custom_call.1} parent=47 // pred_check
          %p476 = pneg %p139
        $region50: #{tpu_custom_call.1} parent=47 // pred_check_branch
          %478 = sbr.rel (%p476) target = $region52
        $region51: #{tpu_custom_call.1} parent=47 // pred_region
          %s479 = sand.u32 %s124, 1
          %s480 = scalar_lea.sflag [#allocation4], %s479
          %s481 = sand.u32 %s124, 1
          %s482 = smul.addr %s481, 16
          %s483 = scalar_lea.vmem [#allocation3], %s482
          %484 = dma.done %s480, 256
        $region52: #{tpu_custom_call.1} parent=47 // pred_fallthru
          _
      $region48: #{tpu_custom_call.1} parent=5 // pred_fallthru
        _
    $region6: #{tpu_custom_call.1} parent=1 // loop_footer
      %s16 = sadd.s32 1, %s12
    $region7: #{tpu_custom_call.1} parent=1 // loop_footer_branch
      %11 = sbr.rel target = $region3
    $region8: #{tpu_custom_call.1} parent=1 // loop_exit
      _
    %485 = vsyncpa [#allocation4], 1
    %s486 = scalar_lea.sflag [#allocation4], 1
    %487 = vsyncpa %s486, 1

</llo_original>
